<compile_context>
chip_gen: v5e
topology: v5e:2x2
jax: 0.10.0
libtpu: 0.0.40
codegen_flags: <defaults>
</compile_context>

<pallas_src>
import jax
import jax.numpy as jnp
from jax.experimental import pallas as pl
from jax.experimental.pallas import tpu as pltpu


# --------------------------------------------------------------------------- utils
def _round_up(x: int, m: int) -> int:
    return -(-x // m) * m


def _batch_tiling(batch: int, max_tile: int = 1024, split_threshold: int = 256):
    """Bounded, 8-aligned batch tiles; >=2 blocks once batch is large enough to
    shard across v7x's two TensorCores.  Returns (tile_b, n_blocks, padded_batch)."""
    batch_p = _round_up(batch, 8)
    if batch_p <= split_threshold:
        tile_b = batch_p
    else:
        tile_b = min(max_tile, _round_up(-(-batch_p // 2), 8))
    n_blocks = -(-batch_p // tile_b)
    return tile_b, n_blocks, n_blocks * tile_b


def _pack_params(Wzf, Uzf, Wr, Ur, bzf, br):
    """One resident f32 parameter slab:
         rows [0, in_features)                : [Wzf | Wr]          (zero-padded to in_pad rows)
         rows [in_pad, in_pad + units)        : [Uzf | Ur]          (zero-padded to units_pad rows)
         row  [in_pad + units_pad]            : [bzf | br]
    """
    in_features = Wzf.shape[0]
    units = Ur.shape[0]
    in_pad = _round_up(in_features, 8)
    units_pad = _round_up(units, 8)

    w_top = jnp.concatenate([Wzf, Wr], axis=1)                       # (in, 3U)
    w_top = jnp.pad(w_top, ((0, in_pad - in_features), (0, 0)))
    u_all = jnp.concatenate([Uzf, Ur], axis=1)                       # (U, 3U)
    u_all = jnp.pad(u_all, ((0, units_pad - units), (0, 0)))
    bias = jnp.concatenate([bzf, br]).reshape(1, 3 * units)
    return jnp.concatenate([w_top, u_all, bias], axis=0).astype(jnp.float32)


# ------------------------------------------------------------------- per-step kernel
def gru_step_kernel(u_ref, xk_ref, params_ref, xp_ref):
    units = xk_ref.shape[-1]
    in_features = u_ref.shape[-1]
    units_pad = _round_up(units, 8)
    in_pad = params_ref.shape[0] - units_pad - 1

    u = u_ref[...]                                                    # (tile_b, in)   f32
    xk = xk_ref[...]                                                  # (tile_b, U)    f32

    # Static slices of the resident parameter slab (views, no runtime cost).
    w_top = params_ref[0:in_features, :]                              # (in, 3U): [Wzf|Wr]
    uzf = params_ref[in_pad:in_pad + units, 0:2 * units]              # (U, 2U)
    ur = params_ref[in_pad:in_pad + units, 2 * units:]                # (U, U)
    bias = params_ref[in_pad + units_pad:in_pad + units_pad + 1, :]   # (1, 3U): [bzf|br]

    # pre = u @ [Wzf | Wr] + [bzf | br]      (one MXU pass, f32)
    pre = jnp.dot(u, w_top, preferred_element_type=jnp.float32) + bias

    # Gates: accumulate xk @ Uzf into the first 2U lanes.
    gates = jax.nn.sigmoid(
        pre[:, :2 * units] + jnp.dot(xk, uzf, preferred_element_type=jnp.float32))
    z = gates[:, :units]
    f = gates[:, units:]

    # Squashed input r: accumulate (f * xk) @ Ur into the last U lanes.
    r = jnp.tanh(
        pre[:, 2 * units:] + jnp.dot(f * xk, ur, preferred_element_type=jnp.float32))

    # x(k+1) = z*xk + (1-z)*r  ==  r + z*(xk - r)
    xp_ref[...] = r + z * (xk - r)


def state_space_gru_forward(u, xk, Wzf, Uzf, Wr, Ur, bzf, br):
    """Single-step forward.  Returns (y, xp) exactly like the PyTorch module."""
    batch, in_features = u.shape
    units = Ur.shape[0]

    params = _pack_params(Wzf, Uzf, Wr, Ur, bzf, br)                  # one resident slab
    tile_b, n_blocks, batch_pad = _batch_tiling(batch)

    u_p, xk_p = u.astype(jnp.float32), xk.astype(jnp.float32)
    if batch_pad != batch:
        u_p = jnp.pad(u_p, ((0, batch_pad - batch), (0, 0)))
        xk_p = jnp.pad(xk_p, ((0, batch_pad - batch), (0, 0)))

    cost = pl.CostEstimate(
        flops=2 * batch_pad * (in_features * 3 * units + units * 2 * units + units * units),
        transcendentals=3 * batch_pad * units,
        bytes_accessed=4 * (u_p.size + xk_p.size + params.size + batch_pad * units),
    )

    xp = pl.pallas_call(
        gru_step_kernel,
        out_shape=jax.ShapeDtypeStruct((batch_pad, units), jnp.float32),
        grid_spec=pltpu.PrefetchScalarGridSpec(
            num_scalar_prefetch=0,
            grid=(n_blocks,),
            in_specs=[
                pl.BlockSpec((tile_b, in_features), lambda i: (i, 0)),   # u
                pl.BlockSpec((tile_b, units), lambda i: (i, 0)),         # x(k)
                pl.BlockSpec(params.shape, lambda i: (0, 0)),            # params (resident)
            ],
            out_specs=pl.BlockSpec((tile_b, units), lambda i: (i, 0)),   # x(k+1)
        ),
        compiler_params=pltpu.CompilerParams(dimension_semantics=("parallel",)),
        cost_estimate=cost,
    )(u_p, xk_p, params)

    if batch_pad != batch:
        xp = xp[:batch]
    # io_delay=True -> y(k) = x(k); returned by identity (no kernel store needed).
    return xk, xp


# ----------------------------------------------------------- fused multi-step kernel
def gru_seq_kernel(uproj_ref, x0_ref, uall_ref, xseq_ref, state_ref):
    units = x0_ref.shape[-1]

    # Initialize the carried state at the first time step of each batch block.
    @pl.when(pl.program_id(1) == 0)
    def _():
        state_ref[...] = x0_ref[...]

    xk = state_ref[...]                                               # (tile_b, U)
    pre = uproj_ref[0]                                                # (tile_b, 3U) = u@[Wzf|Wr]+b (hoisted)
    uzf = uall_ref[:, :2 * units]                                     # (U, 2U)
    ur = uall_ref[:, 2 * units:]                                      # (U, U)

    gates = jax.nn.sigmoid(
        pre[:, :2 * units] + jnp.dot(xk, uzf, preferred_element_type=jnp.float32))
    z = gates[:, :units]
    f = gates[:, units:]
    r = jnp.tanh(
        pre[:, 2 * units:] + jnp.dot(f * xk, ur, preferred_element_type=jnp.float32))

    xp = r + z * (xk - r)
    state_ref[...] = xp
    xseq_ref[0, :, :] = xp


def state_space_gru_sequence(u_seq, x0, Wzf, Uzf, Wr, Ur, bzf, br):
    """T recurrence steps fused into ONE pallas_call (the review's top item).
    Returns (y_seq, x_seq) with y(k) = x(k) (io_delay=True) and x_seq[t] = x(t+1)."""
    T, batch, in_features = u_seq.shape
    units = Ur.shape[0]
    hp = jax.lax.Precision.HIGHEST

    # Hoist the input projection for ALL steps into one big matmul outside the loop.
    W_top = jnp.concatenate([Wzf, Wr], axis=1)                        # (in, 3U)
    bias = jnp.concatenate([bzf, br])
    u_proj = (jnp.einsum("tbi,ij->tbj", u_seq.astype(jnp.float32), W_top,
                         precision=hp) + bias).astype(jnp.float32)     # (T, B, 3U)
    U_all = jnp.concatenate([Uzf, Ur], axis=1).astype(jnp.float32)    # (U, 3U) VMEM-resident

    tile_b, n_blocks, batch_pad = _batch_tiling(batch)
    x0_p = x0.astype(jnp.float32)
    if batch_pad != batch:
        u_proj = jnp.pad(u_proj, ((0, 0), (0, batch_pad - batch), (0, 0)))
        x0_p = jnp.pad(x0_p, ((0, batch_pad - batch), (0, 0)))

    x_seq = pl.pallas_call(
        gru_seq_kernel,
        out_shape=jax.ShapeDtypeStruct((T, batch_pad, units), jnp.float32),
        grid_spec=pltpu.PrefetchScalarGridSpec(
            num_scalar_prefetch=0,
            grid=(n_blocks, T),                                        # batch outer, time inner
            in_specs=[
                pl.BlockSpec((1, tile_b, 3 * units), lambda b, t: (t, b, 0)),  # u_proj[t]
                pl.BlockSpec((tile_b, units), lambda b, t: (b, 0)),            # x0 (per block)
                pl.BlockSpec((units, 3 * units), lambda b, t: (0, 0)),         # [Uzf|Ur] resident
            ],
            out_specs=pl.BlockSpec((1, tile_b, units), lambda b, t: (t, b, 0)),
            scratch_shapes=[pltpu.VMEM((tile_b, units), jnp.float32)],         # carried state
        ),
        compiler_params=pltpu.CompilerParams(
            dimension_semantics=("parallel", "arbitrary")),
    )(u_proj, x0_p, U_all)

    if batch_pad != batch:
        x_seq = x_seq[:, :batch]
    # io_delay=True: y(k) = x(k)  ->  [x0, x1, ..., x_{T-1}]
    y_seq = jnp.concatenate([x0[None].astype(jnp.float32), x_seq[:-1]], axis=0)
    return y_seq, x_seq


# ------------------------------------------------------------------------- reference
def reference_forward(u, xk, Wzf, Uzf, Wr, Ur, bzf, br):
    units = Ur.shape[0]
    hp = jax.lax.Precision.HIGHEST
    gates = jax.nn.sigmoid(jnp.dot(u, Wzf, precision=hp)
                           + jnp.dot(xk, Uzf, precision=hp) + bzf)
    z, f = gates[:, :units], gates[:, units:]
    r = jnp.tanh(jnp.dot(u, Wr, precision=hp)
                 + jnp.dot(f * xk, Ur, precision=hp) + br)
    xp = z * xk + (1.0 - z) * r
    return xk, xp


def reference_sequence(u_seq, x0, *params):
    xk = x0
    ys, xs = [], []
    for t in range(u_seq.shape[0]):
        y, xk = reference_forward(u_seq[t], xk, *params)
        ys.append(y)
        xs.append(xk)
    return jnp.stack(ys), jnp.stack(xs)


# ------------------------------------------------------------------------------ main
if __name__ == "__main__":
    units = 32
    in_features = 4
    batch = 8
    T = 8

    key = jax.random.PRNGKey(0)
    k_u, k_x, k_wzf, k_uzf, k_wr, k_ur, k_useq, k_x0 = jax.random.split(key, 8)

    # reset_parameters(): W*, U* ~ uniform(-1/units, 1/units); biases = zeros.
    lim = 1.0 / units
    Wzf = jax.random.uniform(k_wzf, (in_features, 2 * units), jnp.float32, -lim, lim)
    Uzf = jax.random.uniform(k_uzf, (units, 2 * units), jnp.float32, -lim, lim)
    Wr = jax.random.uniform(k_wr, (in_features, units), jnp.float32, -lim, lim)
    Ur = jax.random.uniform(k_ur, (units, units), jnp.float32, -lim, lim)
    bzf = jnp.zeros((2 * units,), jnp.float32)
    br = jnp.zeros((units,), jnp.float32)
    params = (Wzf, Uzf, Wr, Ur, bzf, br)

    # ---- single-step forward (module API) ----
    u = jax.random.normal(k_u, (batch, in_features), jnp.float32)
    xk = 0.5 * jax.random.normal(k_x, (batch, units), jnp.float32)

    y, xp = state_space_gru_forward(u, xk, *params)
    jax.block_until_ready((y, xp))

    y_ref, xp_ref = reference_forward(u, xk, *params)
    assert jnp.array_equal(y, y_ref)                                   # identity, bit-exact
    assert jnp.allclose(xp, xp_ref, atol=1e-4, rtol=1e-4)              # pure-f32 path

    # ---- fused multi-step recurrence (one pallas_call for T steps) ----
    u_seq = jax.random.normal(k_useq, (T, batch, in_features), jnp.float32)
    x0 = 0.5 * jax.random.normal(k_x0, (batch, units), jnp.float32)

    y_seq, x_seq = state_space_gru_sequence(u_seq, x0, *params)
    jax.block_until_ready((y_seq, x_seq))

    y_seq_ref, x_seq_ref = reference_sequence(u_seq, x0, *params)
    assert jnp.allclose(x_seq, x_seq_ref, atol=1e-4, rtol=1e-4)
    assert jnp.allclose(y_seq, y_seq_ref, atol=1e-4, rtol=1e-4)

    print("KERNEL_OK")
</pallas_src>

<mosaic_0001>
module attributes {stable_mosaic.version = 11 : i64} {
  func.func @gru_step_kernel(%arg0: i32, %arg1: memref<8x4xf32, #tpu.memory_space<vmem>>, %arg2: memref<8x32xf32, #tpu.memory_space<vmem>>, %arg3: memref<41x96xf32, #tpu.memory_space<vmem>>, %arg4: memref<8x32xf32, #tpu.memory_space<vmem>>) attributes {dimension_semantics = [#tpu.dimension_semantics<parallel>], iteration_bounds = array<i64: 1>, scalar_prefetch = 0 : i64, scratch_operands = 0 : i64, tpu.core_type = #tpu.core_type<tc>, window_params = [{transform_indices = @transform_0, window_bounds = array<i64: 8, 4>}, {transform_indices = @transform_1, window_bounds = array<i64: 8, 32>}, {pipeline_mode = #tpu.pipeline_mode<synchronous>, transform_indices = @transform_2, window_bounds = array<i64: 41, 96>}, {transform_indices = @transform_3, window_bounds = array<i64: 8, 32>}]} {
    %c0 = arith.constant 0 : index
    %c0_0 = arith.constant 0 : index
    %0 = vector.load %arg1[%c0, %c0_0] : memref<8x4xf32, #tpu.memory_space<vmem>>, vector<8x4xf32>
    %c0_1 = arith.constant 0 : index
    %c0_2 = arith.constant 0 : index
    %1 = vector.load %arg2[%c0_1, %c0_2] : memref<8x32xf32, #tpu.memory_space<vmem>>, vector<8x32xf32>
    %c0_3 = arith.constant 0 : index
    %c0_4 = arith.constant 0 : index
    %2 = vector.load %arg3[%c0_3, %c0_4] : memref<41x96xf32, #tpu.memory_space<vmem>>, vector<4x96xf32>
    %c8 = arith.constant 8 : index
    %c0_5 = arith.constant 0 : index
    %3 = vector.load %arg3[%c8, %c0_5] : memref<41x96xf32, #tpu.memory_space<vmem>>, vector<32x64xf32>
    %c8_6 = arith.constant 8 : index
    %c64 = arith.constant 64 : index
    %4 = vector.load %arg3[%c8_6, %c64] : memref<41x96xf32, #tpu.memory_space<vmem>>, vector<32x32xf32>
    %c40 = arith.constant 40 : index
    %c0_7 = arith.constant 0 : index
    %5 = vector.load %arg3[%c40, %c0_7] : memref<41x96xf32, #tpu.memory_space<vmem>>, vector<1x96xf32>
    %cst = arith.constant dense<0.000000e+00> : vector<8x96xf32>
    %6 = tpu.matmul %0, %2, %cst {dimension_numbers = #tpu.dot_dimension_numbers<[1], [0], [0], [1], [0, 0, 1, 1], [], []>} : vector<8x4xf32>, vector<4x96xf32>, vector<8x96xf32> -> vector<8x96xf32>
    %7 = vector.broadcast %5 : vector<1x96xf32> to vector<8x96xf32>
    %8 = arith.addf %6, %7 : vector<8x96xf32>
    %9 = vector.extract_strided_slice %8 {offsets = [0, 0], sizes = [8, 64], strides = [1, 1]} : vector<8x96xf32> to vector<8x64xf32>
    %cst_8 = arith.constant dense<0.000000e+00> : vector<8x64xf32>
    %10 = tpu.matmul %1, %3, %cst_8 {dimension_numbers = #tpu.dot_dimension_numbers<[1], [0], [0], [1], [0, 0, 1, 1], [], []>} : vector<8x32xf32>, vector<32x64xf32>, vector<8x64xf32> -> vector<8x64xf32>
    %11 = arith.addf %9, %10 : vector<8x64xf32>
    %12 = arith.negf %11 : vector<8x64xf32>
    %13 = math.exp %12 : vector<8x64xf32>
    %cst_9 = arith.constant 1.000000e+00 : f32
    %14 = vector.broadcast %cst_9 : f32 to vector<8x64xf32>
    %15 = arith.addf %14, %13 : vector<8x64xf32>
    %16 = arith.divf %14, %15 : vector<8x64xf32>
    %17 = vector.extract_strided_slice %16 {offsets = [0, 0], sizes = [8, 32], strides = [1, 1]} : vector<8x64xf32> to vector<8x32xf32>
    %18 = vector.extract_strided_slice %16 {offsets = [0, 32], sizes = [8, 32], strides = [1, 1]} : vector<8x64xf32> to vector<8x32xf32>
    %19 = vector.extract_strided_slice %8 {offsets = [0, 64], sizes = [8, 32], strides = [1, 1]} : vector<8x96xf32> to vector<8x32xf32>
    %20 = arith.mulf %18, %1 : vector<8x32xf32>
    %cst_10 = arith.constant dense<0.000000e+00> : vector<8x32xf32>
    %21 = tpu.matmul %20, %4, %cst_10 {dimension_numbers = #tpu.dot_dimension_numbers<[1], [0], [0], [1], [0, 0, 1, 1], [], []>} : vector<8x32xf32>, vector<32x32xf32>, vector<8x32xf32> -> vector<8x32xf32>
    %22 = arith.addf %19, %21 : vector<8x32xf32>
    %23 = math.tanh %22 : vector<8x32xf32>
    %24 = arith.subf %1, %23 : vector<8x32xf32>
    %25 = arith.mulf %17, %24 : vector<8x32xf32>
    %26 = arith.addf %23, %25 : vector<8x32xf32>
    %c0_11 = arith.constant 0 : index
    %c0_12 = arith.constant 0 : index
    %27 = vector.load %arg4[%c0_11, %c0_12] : memref<8x32xf32, #tpu.memory_space<vmem>>, vector<8x32xf32>
    tpu.vector_store %arg4[%c0_11, %c0_12], %26 {strides = array<i32>} : memref<8x32xf32, #tpu.memory_space<vmem>>, vector<8x32xf32>,
    return
  }
  func.func @transform_0(%arg0: i32) -> (i32, i32) {
    %c0_i32 = arith.constant 0 : i32
    %c0_i32_0 = arith.constant 0 : i32
    return %arg0, %c0_i32 : i32, i32
  }
  func.func @transform_1(%arg0: i32) -> (i32, i32) {
    %c0_i32 = arith.constant 0 : i32
    %c0_i32_0 = arith.constant 0 : i32
    return %arg0, %c0_i32 : i32, i32
  }
  func.func @transform_2(%arg0: i32) -> (i32, i32) {
    %c0_i32 = arith.constant 0 : i32
    %c0_i32_0 = arith.constant 0 : i32
    %c0_i32_1 = arith.constant 0 : i32
    return %c0_i32, %c0_i32_0 : i32, i32
  }
  func.func @transform_3(%arg0: i32) -> (i32, i32) {
    %c0_i32 = arith.constant 0 : i32
    %c0_i32_0 = arith.constant 0 : i32
    return %arg0, %c0_i32 : i32, i32
  }
}

</mosaic_0001>

<llo_original>
// kernel: tpu_custom_call.1
$region0: #{tpu_custom_call.1}
  #allocation0 [shape = 'u32[]', space=smem, size = 0x4, offset = 0x4, fixed_abs, tag = 'smem constant byte address 0x4 - core index']
  #allocation1 [shape = 'u32[72,128]{1,0:T(1,128)}', space=vmem, size = 0x9000, scoped, tag = 'internal scratch']
  %s0 = inlined_call_operand.vmem [shape: f32[8,4], index: 0, kind: input, shape index: {}]
  %s1 = inlined_call_operand.vmem [shape: f32[8,32], index: 1, kind: input, shape index: {}]
  %s2 = inlined_call_operand.hbm [shape: f32[41,96], index: 2, kind: input, shape index: {}]
  %s3 = inlined_call_operand.hbm [shape: f32[8,32], index: 3, kind: output, shape index: {}]
  %s4 = sld [smem:[#allocation0]]
  $region26: #{tpu_custom_call.1} parent=0
    _
  %s6 = ssub.s32 1, %s4
  %s7 = scalar_select 0, %s6, %s4
  $region1: #{tpu_custom_call.1} parent=0
    #allocation2 [shape = 'u8[24576]{0}', space=vmem, size = 0x6000, scoped, tag = 'input window, operand 2, single buffered']
    #allocation3 [shape = 's32[1]{0}', space=sflag, size = 0x4, scoped, tag = 'scoped memory for tpu_custom_call.1']
    #allocation4 [shape = 's32[1]{0}', space=sflag, size = 0x4, scoped, tag = 'scoped memory for tpu_custom_call.1']
    #allocation5 [shape = 'u8[4096]{0}', space=vmem, size = 0x1000, scoped, tag = 'output window, operand 0, single buffered']
    %8 = vsyncpa [#allocation3], 0
    %9 = vsyncpa [#allocation4], 0
    // Predicated region
    $region2: #{tpu_custom_call.1} parent=1 // pred_check
      _
    $region3: #{tpu_custom_call.1} parent=1 // pred_check_branch
      %11 = sbr.rel (0) target = $region5
    $region4: #{tpu_custom_call.1} parent=1 // pred_region
      _
    $region5: #{tpu_custom_call.1} parent=1 // pred_fallthru
      _
    // Predicated region
    $region6: #{tpu_custom_call.1} parent=1 // pred_check
      _
    $region7: #{tpu_custom_call.1} parent=1 // pred_check_branch
      %13 = sbr.rel (0) target = $region9
    $region8: #{tpu_custom_call.1} parent=1 // pred_region
      _
    $region9: #{tpu_custom_call.1} parent=1 // pred_fallthru
      _
    // Predicated region
    $region10: #{tpu_custom_call.1} parent=1 // pred_check
      _
    $region11: #{tpu_custom_call.1} parent=1 // pred_check_branch
      %15 = sbr.rel (0) target = $region13
    $region12: #{tpu_custom_call.1} parent=1 // pred_region
      %17 = vsyncadd [#allocation3], 0
      %s18 = sshll.u32 %s2, 4
      %s19 = int_to_ptr.hbm [resolvable:$true] %s18
      %s20 = sshll.u32 [#allocation2], 4
      %s21 = int_to_ptr.vmem [resolvable:$true] %s20
      %26 = dma.hbm_to_vmem [thread:$0]  %s19, 768, %s21, [#allocation3], 128, 128, 8
    $region13: #{tpu_custom_call.1} parent=1 // pred_fallthru
      _
    // Predicated region
    $region14: #{tpu_custom_call.1} parent=1 // pred_check
      _
    $region15: #{tpu_custom_call.1} parent=1 // pred_check_branch
      %28 = sbr.rel (0) target = $region17
    $region16: #{tpu_custom_call.1} parent=1 // pred_region
      %30 = dma.done [#allocation3], 768
    $region17: #{tpu_custom_call.1} parent=1 // pred_fallthru
      _
    %v31 = vld [vmem:[%s0] sm:$0xff]
    %v32 = vld [vmem:[%s1] sm:$0xff]
    %v33 = vld [vmem:[#allocation2] sm:$0xf]
    %v34 = vld [vmem:[#allocation2 + $0x8] sm:$0xff]
    %v35 = vld [vmem:[#allocation2 + $0x10] sm:$0xff]
    %v36 = vld [vmem:[#allocation2 + $0x18] sm:$0xff]
    %v37 = vld [vmem:[#allocation2 + $0x20] sm:$0xff]
    %v38 = vld [vmem:[#allocation2 + $0x28] sm:$0x1]
    %v39 = vperm.slane %v38, 0
    %vm40 = vcmask 31744
    %v42 = vsel %vm40, %v31, 0
    %vm44 = vcmask 1043456
    %v46 = vsel %vm44, %v33, 0
    %48 = vmatpush.msra.mxu0 0.0
    %49 = vmatpush.msra.mxu0 0.0
    %50 = vmatpush.msra.mxu0 0.0
    %51 = vmatpush.msra.mxu0 0.0
    %52 = vmatpush.msra.mxu0 0.0
    %53 = vmatpush.msra.mxu0 0.0
    %54 = vmatpush.msra.mxu0 0.0
    %55 = vmatpush.msra.mxu0 0.0
    %56 = vmatpush.msra.mxu0 0.0
    %57 = vmatpush.msra.mxu0 0.0
    %58 = vmatpush.msra.mxu0 0.0
    %59 = vmatpush.msra.mxu0 0.0
    %60 = vmatpush.msra.mxu0 0.0
    %61 = vmatpush.msra.mxu0 0.0
    %62 = vmatpush.msra.mxu0 0.0
    %63 = vmatpush.msra.mxu0 %v46
    %64 = vmatmul.f32.gmra.mxu0 %v42
    %v65 = vpop.f32.mrf.mxu0
    %v66 = vadd.f32 %v39, %v65
    %67 = vdwg.mxu0
    %vm68 = vcmask 261120
    %v70 = vsel %vm68, %v32, 0
    %72 = vmatpush.msra.mxu0 0.0
    %73 = vmatpush.msra.mxu0 0.0
    %74 = vmatpush.msra.mxu0 0.0
    %75 = vmatpush.msra.mxu0 0.0
    %76 = vmatpush.msra.mxu0 0.0
    %77 = vmatpush.msra.mxu0 0.0
    %78 = vmatpush.msra.mxu0 0.0
    %79 = vmatpush.msra.mxu0 0.0
    %80 = vmatpush.msra.mxu0 0.0
    %81 = vmatpush.msra.mxu0 0.0
    %82 = vmatpush.msra.mxu0 0.0
    %83 = vmatpush.msra.mxu0 0.0
    %84 = vmatpush.msra.mxu0 %v37
    %85 = vmatpush.msra.mxu0 %v36
    %86 = vmatpush.msra.mxu0 %v35
    %87 = vmatpush.msra.mxu0 %v34
    %88 = vmatmul.f32.gmra.mxu0 %v70
    %v89 = vpop.f32.mrf.mxu0
    %v90 = vadd.f32 0.0, %v89
    %91 = vdwg.mxu0
    %v92 = vadd.f32 %v66, %v90
    %v93 = vxor.u32 %v92, 2147483648
    %v94 = vmul.f32 %v93, 1.442695
    %v95 = vpow.pop %v94
    %v96 = vadd.f32 %v95, 1.0
    %v97 = vrcp.pop %v96
    %v98 = vmul.f32 %v96, %v97
    %v99 = vsub.f32 1.0, %v98
    %v100 = vmul.f32 %v97, %v99
    %v101 = vadd.f32 %v97, %v100
    %vm102 = vweird.f32 %v96
    %vm103 = vweird.f32 %v97
    %vm104 = vmor %vm102, %vm103
    %v105 = vsel %vm104, %v97, %v101
    %v106 = vand.u32 2147483647, %v96
    %vm107 = vcmp.eq.f32.partialorder %v106, 8.507059e+37
    %v108 = vand.u32 %v96, 2147483648
    %v109 = vor.u32 1.1754944e-38, %v108
    %v110 = vsel %vm107, %v109, %v105
    %v111 = vmul.f32 1.0, %v110
    %112 = vrot.lane.b32.xlu0 %v32, 32
    %v113 = vpop.permute.xlu0 %112
    %v115 = vmul.f32 %v111, %v113
    %117 = vrot.lane.b32.xlu0 %v115, 96
    %v118 = vpop.permute.xlu0 %117
    %123 = vrot.lane.b32.xlu0 %v34, 64
    %v124 = vpop.permute.xlu0 %123
    %125 = vrot.lane.b32.xlu0 %v35, 64
    %v126 = vpop.permute.xlu0 %125
    %127 = vrot.lane.b32.xlu0 %v36, 64
    %v128 = vpop.permute.xlu0 %127
    %129 = vrot.lane.b32.xlu0 %v37, 64
    %v130 = vpop.permute.xlu0 %129
    %v135 = vsel %vm68, %v118, 0
    %137 = vmatpush.msra.mxu0 0.0
    %138 = vmatpush.msra.mxu0 0.0
    %139 = vmatpush.msra.mxu0 0.0
    %140 = vmatpush.msra.mxu0 0.0
    %141 = vmatpush.msra.mxu0 0.0
    %142 = vmatpush.msra.mxu0 0.0
    %143 = vmatpush.msra.mxu0 0.0
    %144 = vmatpush.msra.mxu0 0.0
    %145 = vmatpush.msra.mxu0 0.0
    %146 = vmatpush.msra.mxu0 0.0
    %147 = vmatpush.msra.mxu0 0.0
    %148 = vmatpush.msra.mxu0 0.0
    %149 = vmatpush.msra.mxu0 %v130
    %150 = vmatpush.msra.mxu0 %v128
    %151 = vmatpush.msra.mxu0 %v126
    %152 = vmatpush.msra.mxu0 %v124
    %153 = vmatmul.f32.gmra.mxu0 %v135
    %v154 = vpop.f32.mrf.mxu0
    %v155 = vadd.f32 0.0, %v154
    %156 = vdwg.mxu0
    %158 = vrot.lane.b32.xlu0 %v155, 64
    %v159 = vpop.permute.xlu0 %158
    %v161 = vadd.f32 %v66, %v159
    %v162 = vtanh.pop %v161
    %164 = vrot.lane.b32.xlu0 %v162, 64
    %v165 = vpop.permute.xlu0 %164
    %v167 = vsub.f32 %v32, %v165
    %v168 = vmul.f32 %v111, %v167
    %170 = vrot.lane.b32.xlu0 %v168, 64
    %v171 = vpop.permute.xlu0 %170
    %v173 = vadd.f32 %v162, %v171
    %175 = vrot.lane.b32.xlu0 %v173, 64
    %v176 = vpop.permute.xlu0 %175
    %178 = vst.msk [vmem:[#allocation5] sm:$0xff] %vm68, %v176
    // Predicated region
    $region18: #{tpu_custom_call.1} parent=1 // pred_check
      _
    $region19: #{tpu_custom_call.1} parent=1 // pred_check_branch
      %180 = sbr.rel (0) target = $region21
    $region20: #{tpu_custom_call.1} parent=1 // pred_region
      %182 = vsyncadd [#allocation4], 0
      %s184 = sshll.u32 [#allocation5], 4
      %s185 = int_to_ptr.vmem [resolvable:$true] %s184
      %s186 = sshll.u32 %s3, 4
      %s187 = int_to_ptr.hbm [resolvable:$true] %s186
      %189 = dma.vmem_to_hbm [thread:$0]  %s185, 128, %s187, [#allocation4]
    $region21: #{tpu_custom_call.1} parent=1 // pred_fallthru
      _
    // Predicated region
    $region22: #{tpu_custom_call.1} parent=1 // pred_check
      _
    $region23: #{tpu_custom_call.1} parent=1 // pred_check_branch
      %191 = sbr.rel (0) target = $region25
    $region24: #{tpu_custom_call.1} parent=1 // pred_region
      %193 = dma.done [#allocation4], 128
    $region25: #{tpu_custom_call.1} parent=1 // pred_fallthru
      _
    %194 = vsyncpa [#allocation3], 1
    %195 = vsyncpa [#allocation4], 1

</llo_original>
